<compile_context>
chip_gen: v7x
topology: tpu7x:2x2x1
jax: 0.10.0
libtpu: 0.0.40
codegen_flags: <defaults>
</compile_context>

<pallas_src>
import functools

import jax
import jax.numpy as jnp
from jax.experimental import pallas as pl
from jax.experimental.pallas import tpu as pltpu


def _round_up(x, m):
    return (x + m - 1) // m * m


def _dense_layer_kernel(p_ref, w_ref, b_ref, o_ref, *, cout):
    """One flattened-M tile per grid step.

    p_ref: (TILE_M, K)      bf16 im2col patches (K = 9*Cin, unpadded in HBM)
    w_ref: (K, COUT_PAD)    bf16 conv weights with BN scale folded in (lane-padded)
    b_ref: (1, COUT_PAD)    f32  fused bias (conv bias folded through BN)
    o_ref: (TILE_M, Cout)   output tile -- only the real channels are written back
    """
    acc = jnp.dot(p_ref[...], w_ref[...], preferred_element_type=jnp.float32)
    y = jnp.maximum(acc + b_ref[...], 0.0)
    # Dropout2d: identity in eval mode (drop_rate ignored at inference).
    o_ref[...] = y[:, :cout].astype(o_ref.dtype)


@jax.jit
def dense_layer_forward(x_nchw, w_oihw, conv_bias, gamma, beta, run_mean, run_var):
    """Forward pass of _DenseLayer. Input/output are NCHW like the PyTorch module."""
    eps = 1e-5
    N, Cin, H, W = x_nchw.shape
    Cout = w_oihw.shape[0]
    K = 9 * Cin
    COUT_PAD = _round_up(Cout, 128)
    M_total = N * H * W

    # ---------- tile selection over the flattened M axis ----------
    TILE_M = 1024
    if M_total > 1024 and _round_up(M_total, 512) < _round_up(M_total, 1024):
        TILE_M = 512  # 512-row tiles waste less M padding (both hit ~85% of roofline)
    # VMEM budget: double-buffered bf16 patch tile (lane-padded) must leave headroom
    # inside v7x's 64 MiB/TC and the 48 MiB scoped limit below.
    while TILE_M > 128 and 2 * 2 * TILE_M * _round_up(K, 128) > 24 * 1024 * 1024:
        TILE_M //= 2
    if M_total < TILE_M:
        TILE_M = _round_up(M_total, 8)  # single tile for small problems
    M_padded = _round_up(M_total, TILE_M)
    num_m = M_padded // TILE_M

    # ---------- glue: layout, BN fold, im2col (plain JAX, bf16) ----------
    # TODO(synk): when stacked inside a DenseNet keep NHWC end-to-end and drop both
    #             boundary transposes; they exist only to match the NCHW module API.
    x_nhwc = jnp.transpose(x_nchw.astype(jnp.bfloat16), (0, 2, 3, 1))   # NCHW -> NHWC
    x_pad = jnp.pad(x_nhwc, ((0, 0), (1, 1), (1, 1), (0, 0)))           # pad=1 on H, W

    scale = (gamma / jnp.sqrt(run_var + eps)).astype(jnp.float32)       # (Cout,)
    bias = ((conv_bias - run_mean) * scale + beta).astype(jnp.float32)  # (Cout,)

    # Fold BN scale into the conv weights; lay out as (K=9*Cin, Cout), lane-pad Cout only.
    w_hwio = jnp.transpose(w_oihw, (2, 3, 1, 0)).astype(jnp.float32)    # (3,3,Cin,Cout)
    w_folded = (w_hwio * scale[None, None, None, :]).reshape(K, Cout)
    w_p = jnp.zeros((K, COUT_PAD), jnp.float32).at[:, :Cout].set(w_folded)
    w_p = w_p.astype(jnp.bfloat16)
    b_p = jnp.zeros((1, COUT_PAD), jnp.float32).at[0, :Cout].set(bias)

    # im2col: tap-major (kh, kw, cin) K ordering matches w_folded's reshape order.
    taps = [x_pad[:, kh:kh + H, kw:kw + W, :] for kh in range(3) for kw in range(3)]
    patches = jnp.concatenate(taps, axis=-1).reshape(M_total, K)        # bf16, unpadded K
    if M_padded != M_total:
        patches = jnp.pad(patches, ((0, M_padded - M_total), (0, 0)))

    out_dtype = x_nchw.dtype

    # ---------- hot path: Pallas kernel ----------
    flops = 2 * M_padded * K * COUT_PAD
    bytes_accessed = (patches.size * 2 + w_p.size * 2 + b_p.size * 4
                      + M_padded * Cout * x_nchw.dtype.itemsize)
    cost = pl.CostEstimate(flops=flops, transcendentals=0,
                           bytes_accessed=bytes_accessed)

    out_flat = pl.pallas_call(
        functools.partial(_dense_layer_kernel, cout=Cout),
        out_shape=jax.ShapeDtypeStruct((M_padded, Cout), out_dtype),
        grid_spec=pltpu.PrefetchScalarGridSpec(
            num_scalar_prefetch=0,
            grid=(num_m,),
            in_specs=[
                pl.BlockSpec((TILE_M, K), lambda m: (m, 0)),
                pl.BlockSpec((K, COUT_PAD), lambda m: (0, 0)),
                pl.BlockSpec((1, COUT_PAD), lambda m: (0, 0)),
            ],
            out_specs=pl.BlockSpec((TILE_M, Cout), lambda m: (m, 0)),
        ),
        compiler_params=pltpu.CompilerParams(
            dimension_semantics=("parallel",),
            vmem_limit_bytes=48 * 1024 * 1024,
        ),
        cost_estimate=cost,
    )(patches, w_p, b_p)

    # Drop the M padding rows and return NCHW like the PyTorch module.
    out = out_flat[:M_total].reshape(N, H, W, Cout)
    return jnp.transpose(out, (0, 3, 1, 2))


def _reference_forward(x_nchw, w_oihw, conv_bias, gamma, beta, run_mean, run_var):
    """Pure-JAX f32 reference (XLA conv) for correctness checking."""
    eps = 1e-5
    y = jax.lax.conv_general_dilated(
        x_nchw.astype(jnp.float32), w_oihw.astype(jnp.float32),
        window_strides=(1, 1), padding=((1, 1), (1, 1)),
        dimension_numbers=("NCHW", "OIHW", "NCHW"))
    y = y + conv_bias.reshape(1, -1, 1, 1)
    y = (y - run_mean.reshape(1, -1, 1, 1)) / jnp.sqrt(run_var.reshape(1, -1, 1, 1) + eps)
    y = y * gamma.reshape(1, -1, 1, 1) + beta.reshape(1, -1, 1, 1)
    return jnp.maximum(y, 0.0)


if __name__ == "__main__":
    key = jax.random.PRNGKey(0)
    k_x, k_w, k_b, k_g, k_be, k_m, k_v = jax.random.split(key, 7)

    N, Cin, H, W = 2, 4, 16, 16
    Cout = 8
    drop_rate = 0.1  # unused at inference (Dropout2d is identity in eval mode)

    x = jax.random.normal(k_x, (N, Cin, H, W), dtype=jnp.float32)
    w = jax.random.normal(k_w, (Cout, Cin, 3, 3), dtype=jnp.float32) * 0.1
    conv_bias = jax.random.normal(k_b, (Cout,), dtype=jnp.float32) * 0.05
    gamma = 1.0 + 0.1 * jax.random.normal(k_g, (Cout,), dtype=jnp.float32)
    beta = 0.05 * jax.random.normal(k_be, (Cout,), dtype=jnp.float32)
    run_mean = 0.1 * jax.random.normal(k_m, (Cout,), dtype=jnp.float32)
    run_var = jnp.abs(1.0 + 0.1 * jax.random.normal(k_v, (Cout,), dtype=jnp.float32))

    out = jax.block_until_ready(
        dense_layer_forward(x, w, conv_bias, gamma, beta, run_mean, run_var))
    ref = _reference_forward(x, w, conv_bias, gamma, beta, run_mean, run_var)

    assert out.shape == (N, Cout, H, W), out.shape
    # bf16 matmul operands with f32 accumulation: tolerance sized for bf16 rounding.
    max_err = float(jnp.max(jnp.abs(out - ref)))
    assert max_err < 5e-2, max_err

    print("KERNEL_OK")
</pallas_src>

<mosaic_0001>
module attributes {stable_mosaic.version = 11 : i64} {
  func.func @_dense_layer_kernel(%arg0: i32, %arg1: memref<512x36xbf16, #tpu.memory_space<vmem>>, %arg2: memref<36x128xbf16, #tpu.memory_space<vmem>>, %arg3: memref<1x128xf32, #tpu.memory_space<vmem>>, %arg4: memref<512x8xf32, #tpu.memory_space<vmem>>) attributes {dimension_semantics = [#tpu.dimension_semantics<parallel>], iteration_bounds = array<i64: 1>, scalar_prefetch = 0 : i64, scratch_operands = 0 : i64, tpu.core_type = #tpu.core_type<tc>, window_params = [{transform_indices = @transform_0, window_bounds = array<i64: 512, 36>}, {pipeline_mode = #tpu.pipeline_mode<synchronous>, transform_indices = @transform_1, window_bounds = array<i64: 36, 128>}, {pipeline_mode = #tpu.pipeline_mode<synchronous>, transform_indices = @transform_2, window_bounds = array<i64: 1, 128>}, {transform_indices = @transform_3, window_bounds = array<i64: 512, 8>}]} {
    %c0 = arith.constant 0 : index
    %c0_0 = arith.constant 0 : index
    %0 = vector.load %arg1[%c0, %c0_0] : memref<512x36xbf16, #tpu.memory_space<vmem>>, vector<512x36xbf16>
    %c0_1 = arith.constant 0 : index
    %c0_2 = arith.constant 0 : index
    %1 = vector.load %arg2[%c0_1, %c0_2] : memref<36x128xbf16, #tpu.memory_space<vmem>>, vector<36x128xbf16>
    %cst = arith.constant dense<0.000000e+00> : vector<512x128xf32>
    %2 = tpu.matmul %0, %1, %cst {dimension_numbers = #tpu.dot_dimension_numbers<[1], [0], [0], [1], [0, 0, 1, 1], [], []>} : vector<512x36xbf16>, vector<36x128xbf16>, vector<512x128xf32> -> vector<512x128xf32>
    %c0_3 = arith.constant 0 : index
    %c0_4 = arith.constant 0 : index
    %3 = vector.load %arg3[%c0_3, %c0_4] : memref<1x128xf32, #tpu.memory_space<vmem>>, vector<1x128xf32>
    %4 = vector.broadcast %3 : vector<1x128xf32> to vector<512x128xf32>
    %5 = arith.addf %2, %4 : vector<512x128xf32>
    %cst_5 = arith.constant 0.000000e+00 : f32
    %6 = vector.broadcast %cst_5 : f32 to vector<512x128xf32>
    %7 = arith.maximumf %5, %6 : vector<512x128xf32>
    %8 = vector.extract_strided_slice %7 {offsets = [0, 0], sizes = [512, 8], strides = [1, 1]} : vector<512x128xf32> to vector<512x8xf32>
    %c0_6 = arith.constant 0 : index
    %c0_7 = arith.constant 0 : index
    %9 = vector.load %arg4[%c0_6, %c0_7] : memref<512x8xf32, #tpu.memory_space<vmem>>, vector<512x8xf32>
    tpu.vector_store %arg4[%c0_6, %c0_7], %8 {strides = array<i32>} : memref<512x8xf32, #tpu.memory_space<vmem>>, vector<512x8xf32>,
    return
  }
  func.func @transform_0(%arg0: i32) -> (i32, i32) {
    %c0_i32 = arith.constant 0 : i32
    %c0_i32_0 = arith.constant 0 : i32
    return %arg0, %c0_i32 : i32, i32
  }
  func.func @transform_1(%arg0: i32) -> (i32, i32) {
    %c0_i32 = arith.constant 0 : i32
    %c0_i32_0 = arith.constant 0 : i32
    %c0_i32_1 = arith.constant 0 : i32
    return %c0_i32, %c0_i32_0 : i32, i32
  }
  func.func @transform_2(%arg0: i32) -> (i32, i32) {
    %c0_i32 = arith.constant 0 : i32
    %c0_i32_0 = arith.constant 0 : i32
    %c0_i32_1 = arith.constant 0 : i32
    return %c0_i32, %c0_i32_0 : i32, i32
  }
  func.func @transform_3(%arg0: i32) -> (i32, i32) {
    %c0_i32 = arith.constant 0 : i32
    %c0_i32_0 = arith.constant 0 : i32
    return %arg0, %c0_i32 : i32, i32
  }
}

</mosaic_0001>

<llo_original>
// kernel: dense_layer_forward.1
$region0: #{dense_layer_forward.1}
  #allocation0 [shape = 'u32[]', space=smem, size = 0x4, offset = 0x4, fixed_abs, tag = 'smem constant byte address 0x4 - core index']
  #allocation1 [shape = 'u32[144,128]{1,0:T(1,128)}', space=vmem, size = 0x12000, scoped, tag = 'internal scratch']
  %s0 = inlined_call_operand.vmem [shape: bf16[512,36], index: 0, kind: input, shape index: {}]
  %s1 = inlined_call_operand.vmem [shape: bf16[36,128], index: 1, kind: input, shape index: {}]
  %s2 = inlined_call_operand.vmem [shape: f32[1,128], index: 2, kind: input, shape index: {}]
  %s3 = inlined_call_operand.vmem [shape: f32[512,8], index: 3, kind: output, shape index: {}]
  %s4 = sld [smem:[#allocation0]]
  $region22: #{dense_layer_forward.1} parent=0
    _
  %s6 = ssub.s32 1, %s4
  %s7 = scalar_select 0, %s6, %s4
  // Predicated region
  $region2: #{dense_layer_forward.1} parent=0 // pred_check
    _
  $region3: #{dense_layer_forward.1} parent=0 // pred_check_branch
    %9 = sbr.rel (0) target = $region5
  $region4: #{dense_layer_forward.1} parent=0 // pred_region
    _
  $region5: #{dense_layer_forward.1} parent=0 // pred_fallthru
    _
  // Predicated region
  $region6: #{dense_layer_forward.1} parent=0 // pred_check
    _
  $region7: #{dense_layer_forward.1} parent=0 // pred_check_branch
    %11 = sbr.rel (0) target = $region9
  $region8: #{dense_layer_forward.1} parent=0 // pred_region
    _
  $region9: #{dense_layer_forward.1} parent=0 // pred_fallthru
    _
  // Predicated region
  $region10: #{dense_layer_forward.1} parent=0 // pred_check
    _
  $region11: #{dense_layer_forward.1} parent=0 // pred_check_branch
    %13 = sbr.rel (0) target = $region13
  $region12: #{dense_layer_forward.1} parent=0 // pred_region
    _
  $region13: #{dense_layer_forward.1} parent=0 // pred_fallthru
    _
  %v15 = vld [vmem:[%s0] sm:$0xf]
  %v16 = vld [vmem:[%s0 + $0x4] sm:$0xf]
  %v17 = vld [vmem:[%s0 + $0x8] sm:$0xf]
  %v18 = vld [vmem:[%s0 + $0xc] sm:$0xf]
  %v19 = vld [vmem:[%s0 + $0x10] sm:$0xf]
  %v20 = vld [vmem:[%s0 + $0x14] sm:$0xf]
  %v21 = vld [vmem:[%s0 + $0x18] sm:$0xf]
  %v22 = vld [vmem:[%s0 + $0x1c] sm:$0xf]
  %v23 = vld [vmem:[%s0 + $0x20] sm:$0xf]
  %v24 = vld [vmem:[%s0 + $0x24] sm:$0xf]
  %v25 = vld [vmem:[%s0 + $0x28] sm:$0xf]
  %v26 = vld [vmem:[%s0 + $0x2c] sm:$0xf]
  %v27 = vld [vmem:[%s0 + $0x30] sm:$0xf]
  %v28 = vld [vmem:[%s0 + $0x34] sm:$0xf]
  %v29 = vld [vmem:[%s0 + $0x38] sm:$0xf]
  %v30 = vld [vmem:[%s0 + $0x3c] sm:$0xf]
  %v31 = vld [vmem:[%s0 + $0x40] sm:$0xf]
  %v32 = vld [vmem:[%s0 + $0x44] sm:$0xf]
  %v33 = vld [vmem:[%s0 + $0x48] sm:$0xf]
  %v34 = vld [vmem:[%s0 + $0x4c] sm:$0xf]
  %v35 = vld [vmem:[%s0 + $0x50] sm:$0xf]
  %v36 = vld [vmem:[%s0 + $0x54] sm:$0xf]
  %v37 = vld [vmem:[%s0 + $0x58] sm:$0xf]
  %v38 = vld [vmem:[%s0 + $0x5c] sm:$0xf]
  %v39 = vld [vmem:[%s0 + $0x60] sm:$0xf]
  %v40 = vld [vmem:[%s0 + $0x64] sm:$0xf]
  %v41 = vld [vmem:[%s0 + $0x68] sm:$0xf]
  %v42 = vld [vmem:[%s0 + $0x6c] sm:$0xf]
  %v43 = vld [vmem:[%s0 + $0x70] sm:$0xf]
  %v44 = vld [vmem:[%s0 + $0x74] sm:$0xf]
  %v45 = vld [vmem:[%s0 + $0x78] sm:$0xf]
  %v46 = vld [vmem:[%s0 + $0x7c] sm:$0xf]
  %v47 = vld [vmem:[%s0 + $0x80] sm:$0xf]
  %v48 = vld [vmem:[%s0 + $0x84] sm:$0xf]
  %v49 = vld [vmem:[%s0 + $0x88] sm:$0xf]
  %v50 = vld [vmem:[%s0 + $0x8c] sm:$0xf]
  %v51 = vld [vmem:[%s0 + $0x90] sm:$0xf]
  %v52 = vld [vmem:[%s0 + $0x94] sm:$0xf]
  %v53 = vld [vmem:[%s0 + $0x98] sm:$0xf]
  %v54 = vld [vmem:[%s0 + $0x9c] sm:$0xf]
  %v55 = vld [vmem:[%s0 + $0xa0] sm:$0xf]
  %v56 = vld [vmem:[%s0 + $0xa4] sm:$0xf]
  %v57 = vld [vmem:[%s0 + $0xa8] sm:$0xf]
  %v58 = vld [vmem:[%s0 + $0xac] sm:$0xf]
  %v59 = vld [vmem:[%s0 + $0xb0] sm:$0xf]
  %v60 = vld [vmem:[%s0 + $0xb4] sm:$0xf]
  %v61 = vld [vmem:[%s0 + $0xb8] sm:$0xf]
  %v62 = vld [vmem:[%s0 + $0xbc] sm:$0xf]
  %v63 = vld [vmem:[%s0 + $0xc0] sm:$0xf]
  %v64 = vld [vmem:[%s0 + $0xc4] sm:$0xf]
  %v65 = vld [vmem:[%s0 + $0xc8] sm:$0xf]
  %v66 = vld [vmem:[%s0 + $0xcc] sm:$0xf]
  %v67 = vld [vmem:[%s0 + $0xd0] sm:$0xf]
  %v68 = vld [vmem:[%s0 + $0xd4] sm:$0xf]
  %v69 = vld [vmem:[%s0 + $0xd8] sm:$0xf]
  %v70 = vld [vmem:[%s0 + $0xdc] sm:$0xf]
  %v71 = vld [vmem:[%s0 + $0xe0] sm:$0xf]
  %v72 = vld [vmem:[%s0 + $0xe4] sm:$0xf]
  %v73 = vld [vmem:[%s0 + $0xe8] sm:$0xf]
  %v74 = vld [vmem:[%s0 + $0xec] sm:$0xf]
  %v75 = vld [vmem:[%s0 + $0xf0] sm:$0xf]
  %v76 = vld [vmem:[%s0 + $0xf4] sm:$0xf]
  %v77 = vld [vmem:[%s0 + $0xf8] sm:$0xf]
  %v78 = vld [vmem:[%s0 + $0xfc] sm:$0xf]
  %v79 = vld [vmem:[%s1] sm:$0xf]
  %v80 = vld [vmem:[%s1 + $0x4] sm:$0xf]
  %v81 = vld [vmem:[%s1 + $0x8] sm:$0xf]
  %v82 = vld [vmem:[%s1 + $0xc] sm:$0xf]
  %v83 = vld [vmem:[%s1 + $0x10] sm:$0x3]
  %v84 = vld [vmem:[%s2] sm:$0x1]
  %v86 = vlaneseq
  %v87 = vshrl.u32 %v86, 7
  %v88 = vsub.s32 0, %v87
  %v89 = vrot.slane %v84, %v88
  %v155 = vunpack.c.l.b16 %v15
  %v156 = vunpack.c.l.b16 %v16
  %v157 = vunpack.c.l.b16 %v17
  %v158 = vunpack.c.l.b16 %v18
  %v159 = vunpack.c.l.b16 %v19
  %v160 = vunpack.c.l.b16 %v20
  %v161 = vunpack.c.l.b16 %v21
  %v162 = vunpack.c.l.b16 %v22
  %v163 = vunpack.c.l.b16 %v23
  %v164 = vunpack.c.l.b16 %v24
  %v165 = vunpack.c.l.b16 %v25
  %v166 = vunpack.c.l.b16 %v26
  %v167 = vunpack.c.l.b16 %v27
  %v168 = vunpack.c.l.b16 %v28
  %v169 = vunpack.c.l.b16 %v29
  %v170 = vunpack.c.l.b16 %v30
  %v171 = vunpack.c.l.b16 %v31
  %v172 = vunpack.c.l.b16 %v32
  %v173 = vunpack.c.l.b16 %v33
  %v174 = vunpack.c.l.b16 %v34
  %v175 = vunpack.c.l.b16 %v35
  %v176 = vunpack.c.l.b16 %v36
  %v177 = vunpack.c.l.b16 %v37
  %v178 = vunpack.c.l.b16 %v38
  %v179 = vunpack.c.l.b16 %v39
  %v180 = vunpack.c.l.b16 %v40
  %v181 = vunpack.c.l.b16 %v41
  %v182 = vunpack.c.l.b16 %v42
  %v183 = vunpack.c.l.b16 %v43
  %v184 = vunpack.c.l.b16 %v44
  %v185 = vunpack.c.l.b16 %v45
  %v186 = vunpack.c.l.b16 %v46
  %v187 = vunpack.c.l.b16 %v47
  %v188 = vunpack.c.l.b16 %v48
  %v189 = vunpack.c.l.b16 %v49
  %v190 = vunpack.c.l.b16 %v50
  %v191 = vunpack.c.l.b16 %v51
  %v192 = vunpack.c.l.b16 %v52
  %v193 = vunpack.c.l.b16 %v53
  %v194 = vunpack.c.l.b16 %v54
  %v195 = vunpack.c.l.b16 %v55
  %v196 = vunpack.c.l.b16 %v56
  %v197 = vunpack.c.l.b16 %v57
  %v198 = vunpack.c.l.b16 %v58
  %v199 = vunpack.c.l.b16 %v59
  %v200 = vunpack.c.l.b16 %v60
  %v201 = vunpack.c.l.b16 %v61
  %v202 = vunpack.c.l.b16 %v62
  %v203 = vunpack.c.l.b16 %v63
  %v204 = vunpack.c.l.b16 %v64
  %v205 = vunpack.c.l.b16 %v65
  %v206 = vunpack.c.l.b16 %v66
  %v207 = vunpack.c.l.b16 %v67
  %v208 = vunpack.c.l.b16 %v68
  %v209 = vunpack.c.l.b16 %v69
  %v210 = vunpack.c.l.b16 %v70
  %v211 = vunpack.c.l.b16 %v71
  %v212 = vunpack.c.l.b16 %v72
  %v213 = vunpack.c.l.b16 %v73
  %v214 = vunpack.c.l.b16 %v74
  %v215 = vunpack.c.l.b16 %v75
  %v216 = vunpack.c.l.b16 %v76
  %v217 = vunpack.c.l.b16 %v77
  %v218 = vunpack.c.l.b16 %v78
  %v219 = vpack.c.b16 %v156, %v155
  %v220 = vpack.c.b16 %v158, %v157
  %v221 = vpack.c.b16 %v160, %v159
  %v222 = vpack.c.b16 %v162, %v161
  %v223 = vpack.c.b16 %v164, %v163
  %v224 = vpack.c.b16 %v166, %v165
  %v225 = vpack.c.b16 %v168, %v167
  %v226 = vpack.c.b16 %v170, %v169
  %v227 = vpack.c.b16 %v172, %v171
  %v228 = vpack.c.b16 %v174, %v173
  %v229 = vpack.c.b16 %v176, %v175
  %v230 = vpack.c.b16 %v178, %v177
  %v231 = vpack.c.b16 %v180, %v179
  %v232 = vpack.c.b16 %v182, %v181
  %v233 = vpack.c.b16 %v184, %v183
  %v234 = vpack.c.b16 %v186, %v185
  %v235 = vpack.c.b16 %v188, %v187
  %v236 = vpack.c.b16 %v190, %v189
  %v237 = vpack.c.b16 %v192, %v191
  %v238 = vpack.c.b16 %v194, %v193
  %v239 = vpack.c.b16 %v196, %v195
  %v240 = vpack.c.b16 %v198, %v197
  %v241 = vpack.c.b16 %v200, %v199
  %v242 = vpack.c.b16 %v202, %v201
  %v243 = vpack.c.b16 %v204, %v203
  %v244 = vpack.c.b16 %v206, %v205
  %v245 = vpack.c.b16 %v208, %v207
  %v246 = vpack.c.b16 %v210, %v209
  %v247 = vpack.c.b16 %v212, %v211
  %v248 = vpack.c.b16 %v214, %v213
  %v249 = vpack.c.b16 %v216, %v215
  %v250 = vpack.c.b16 %v218, %v217
  %v256 = vunpack.c.l.b16 %v79
  %v257 = vunpack.c.l.b16 %v80
  %v258 = vunpack.c.l.b16 %v81
  %v259 = vunpack.c.l.b16 %v82
  %v260 = vunpack.c.l.b16 %v83
  %v261 = vpack.c.b16 %v257, %v256
  %v262 = vpack.c.b16 %v259, %v258
  %v263 = vpack.c.b16 %v260, %v260
  %vm266 = vcmask 293888
  %v268 = vsel %vm266, %v219, 0
  %v271 = vsel %vm266, %v220, 0
  %v274 = vsel %vm266, %v221, 0
  %v277 = vsel %vm266, %v222, 0
  %v280 = vsel %vm266, %v223, 0
  %v283 = vsel %vm266, %v224, 0
  %v286 = vsel %vm266, %v225, 0
  %v289 = vsel %vm266, %v226, 0
  %v292 = vsel %vm266, %v227, 0
  %v295 = vsel %vm266, %v228, 0
  %v298 = vsel %vm266, %v229, 0
  %v301 = vsel %vm266, %v230, 0
  %v304 = vsel %vm266, %v231, 0
  %v307 = vsel %vm266, %v232, 0
  %v310 = vsel %vm266, %v233, 0
  %v313 = vsel %vm266, %v234, 0
  %v316 = vsel %vm266, %v235, 0
  %v319 = vsel %vm266, %v236, 0
  %v322 = vsel %vm266, %v237, 0
  %v325 = vsel %vm266, %v238, 0
  %v328 = vsel %vm266, %v239, 0
  %v331 = vsel %vm266, %v240, 0
  %v334 = vsel %vm266, %v241, 0
  %v337 = vsel %vm266, %v242, 0
  %v340 = vsel %vm266, %v243, 0
  %v343 = vsel %vm266, %v244, 0
  %v346 = vsel %vm266, %v245, 0
  %v349 = vsel %vm266, %v246, 0
  %v352 = vsel %vm266, %v247, 0
  %v355 = vsel %vm266, %v248, 0
  %v358 = vsel %vm266, %v249, 0
  %v361 = vsel %vm266, %v250, 0
  %vm363 = vcmask 1041408
  %v365 = vsel %vm363, %v263, 0
  %367 = vmatprep.subr.bf16.mxu0 0
  %368 = vmatpush1.bf16.msra.mxu0 %v261
  %369 = vmatprep.subr.bf16.mxu0 0
  %370 = vmatpush1.bf16.msra.mxu0 %v262
  %371 = vmatprep.subr.bf16.mxu0 0
  %372 = vmatpush1.bf16.msra.mxu0 %v365
  %373 = vmatprep.subr.bf16.mxu0 0
  %374 = vmatpush1.bf16.msra.mxu0 0
  %375 = vmatprep.subr.bf16.mxu0 0
  %376 = vmatpush1.bf16.msra.mxu0 0
  %377 = vmatprep.subr.bf16.mxu0 0
  %378 = vmatpush1.bf16.msra.mxu0 0
  %379 = vmatprep.subr.bf16.mxu0 0
  %380 = vmatpush1.bf16.msra.mxu0 0
  %381 = vmatprep.subr.bf16.mxu0 0
  %382 = vmatpush1.bf16.msra.mxu0 0
  %383 = vmatprep.subr.bf16.mxu0 0
  %384 = vmatpush1.bf16.msra.mxu0 0
  %385 = vmatprep.subr.bf16.mxu0 0
  %386 = vmatpush1.bf16.msra.mxu0 0
  %387 = vmatprep.subr.bf16.mxu0 0
  %388 = vmatpush1.bf16.msra.mxu0 0
  %389 = vmatprep.subr.bf16.mxu0 0
  %390 = vmatpush1.bf16.msra.mxu0 0
  %391 = vmatprep.subr.bf16.mxu0 0
  %392 = vmatpush1.bf16.msra.mxu0 0
  %393 = vmatprep.subr.bf16.mxu0 0
  %394 = vmatpush1.bf16.msra.mxu0 0
  %395 = vmatprep.subr.bf16.mxu0 0
  %396 = vmatpush1.bf16.msra.mxu0 0
  %397 = vmatprep.subr.bf16.mxu0 0
  %398 = vmatpush1.bf16.msra.mxu0 0
  %399 = vmatprep.mubr.bf16.mxu0 0
  %400 = vmatmul.mubr.bf16.gmra.mrb[0].mxu0 %v268
  %v401 = vpop.f32.mrb[0].mxu0
  %v402 = vadd.f32 %v89, %v401
  %v403 = vpop.f32.mrb[0].mxu0
  %v404 = vpop.f32.mrb[0].mxu0
  %v405 = vadd.f32 %v89, %v404
  %v406 = vpop.f32.mrb[0].mxu0
  %407 = vmatprep.mubr.bf16.mxu0 0
  %408 = vmatmul.mubr.bf16.gmra.mrb[0].mxu0 %v271
  %v409 = vpop.f32.mrb[0].mxu0
  %v410 = vadd.f32 %v89, %v409
  %v411 = vpop.f32.mrb[0].mxu0
  %v412 = vpop.f32.mrb[0].mxu0
  %v413 = vadd.f32 %v89, %v412
  %v414 = vpop.f32.mrb[0].mxu0
  %415 = vmatprep.mubr.bf16.mxu0 0
  %416 = vmatmul.mubr.bf16.gmra.mrb[0].mxu0 %v274
  %v417 = vpop.f32.mrb[0].mxu0
  %v418 = vadd.f32 %v89, %v417
  %v419 = vpop.f32.mrb[0].mxu0
  %v420 = vpop.f32.mrb[0].mxu0
  %v421 = vadd.f32 %v89, %v420
  %v422 = vpop.f32.mrb[0].mxu0
  %423 = vmatprep.mubr.bf16.mxu0 0
  %424 = vmatmul.mubr.bf16.gmra.mrb[0].mxu0 %v277
  %v425 = vpop.f32.mrb[0].mxu0
  %v426 = vadd.f32 %v89, %v425
  %v427 = vpop.f32.mrb[0].mxu0
  %v428 = vpop.f32.mrb[0].mxu0
  %v429 = vadd.f32 %v89, %v428
  %v430 = vpop.f32.mrb[0].mxu0
  %431 = vmatprep.mubr.bf16.mxu0 0
  %432 = vmatmul.mubr.bf16.gmra.mrb[0].mxu0 %v280
  %v433 = vpop.f32.mrb[0].mxu0
  %v434 = vadd.f32 %v89, %v433
  %v435 = vpop.f32.mrb[0].mxu0
  %v436 = vpop.f32.mrb[0].mxu0
  %v437 = vadd.f32 %v89, %v436
  %v438 = vpop.f32.mrb[0].mxu0
  %439 = vmatprep.mubr.bf16.mxu0 0
  %440 = vmatmul.mubr.bf16.gmra.mrb[0].mxu0 %v283
  %v441 = vpop.f32.mrb[0].mxu0
  %v442 = vadd.f32 %v89, %v441
  %v443 = vpop.f32.mrb[0].mxu0
  %v444 = vpop.f32.mrb[0].mxu0
  %v445 = vadd.f32 %v89, %v444
  %v446 = vpop.f32.mrb[0].mxu0
  %447 = vmatprep.mubr.bf16.mxu0 0
  %448 = vmatmul.mubr.bf16.gmra.mrb[0].mxu0 %v286
  %v449 = vpop.f32.mrb[0].mxu0
  %v450 = vadd.f32 %v89, %v449
  %v451 = vpop.f32.mrb[0].mxu0
  %v452 = vpop.f32.mrb[0].mxu0
  %v453 = vadd.f32 %v89, %v452
  %v454 = vpop.f32.mrb[0].mxu0
  %455 = vmatprep.mubr.bf16.mxu0 0
  %456 = vmatmul.mubr.bf16.gmra.mrb[0].mxu0 %v289
  %v457 = vpop.f32.mrb[0].mxu0
  %v458 = vadd.f32 %v89, %v457
  %v459 = vpop.f32.mrb[0].mxu0
  %v460 = vpop.f32.mrb[0].mxu0
  %v461 = vadd.f32 %v89, %v460
  %v462 = vpop.f32.mrb[0].mxu0
  %463 = vmatprep.mubr.bf16.mxu0 0
  %464 = vmatmul.mubr.bf16.gmra.mrb[0].mxu0 %v292
  %v465 = vpop.f32.mrb[0].mxu0
  %v466 = vadd.f32 %v89, %v465
  %v467 = vpop.f32.mrb[0].mxu0
  %v468 = vpop.f32.mrb[0].mxu0
  %v469 = vadd.f32 %v89, %v468
  %v470 = vpop.f32.mrb[0].mxu0
  %471 = vmatprep.mubr.bf16.mxu0 0
  %472 = vmatmul.mubr.bf16.gmra.mrb[0].mxu0 %v295
  %v473 = vpop.f32.mrb[0].mxu0
  %v474 = vadd.f32 %v89, %v473
  %v475 = vpop.f32.mrb[0].mxu0
  %v476 = vpop.f32.mrb[0].mxu0
  %v477 = vadd.f32 %v89, %v476
  %v478 = vpop.f32.mrb[0].mxu0
  %479 = vmatprep.mubr.bf16.mxu0 0
  %480 = vmatmul.mubr.bf16.gmra.mrb[0].mxu0 %v298
  %v481 = vpop.f32.mrb[0].mxu0
  %v482 = vadd.f32 %v89, %v481
  %v483 = vpop.f32.mrb[0].mxu0
  %v484 = vpop.f32.mrb[0].mxu0
  %v485 = vadd.f32 %v89, %v484
  %v486 = vpop.f32.mrb[0].mxu0
  %487 = vmatprep.mubr.bf16.mxu0 0
  %488 = vmatmul.mubr.bf16.gmra.mrb[0].mxu0 %v301
  %v489 = vpop.f32.mrb[0].mxu0
  %v490 = vadd.f32 %v89, %v489
  %v491 = vpop.f32.mrb[0].mxu0
  %v492 = vpop.f32.mrb[0].mxu0
  %v493 = vadd.f32 %v89, %v492
  %v494 = vpop.f32.mrb[0].mxu0
  %495 = vmatprep.mubr.bf16.mxu0 0
  %496 = vmatmul.mubr.bf16.gmra.mrb[0].mxu0 %v304
  %v497 = vpop.f32.mrb[0].mxu0
  %v498 = vadd.f32 %v89, %v497
  %v499 = vpop.f32.mrb[0].mxu0
  %v500 = vpop.f32.mrb[0].mxu0
  %v501 = vadd.f32 %v89, %v500
  %v502 = vpop.f32.mrb[0].mxu0
  %503 = vmatprep.mubr.bf16.mxu0 0
  %504 = vmatmul.mubr.bf16.gmra.mrb[0].mxu0 %v307
  %v505 = vpop.f32.mrb[0].mxu0
  %v506 = vadd.f32 %v89, %v505
  %v507 = vpop.f32.mrb[0].mxu0
  %v508 = vpop.f32.mrb[0].mxu0
  %v509 = vadd.f32 %v89, %v508
  %v510 = vpop.f32.mrb[0].mxu0
  %511 = vmatprep.mubr.bf16.mxu0 0
  %512 = vmatmul.mubr.bf16.gmra.mrb[0].mxu0 %v310
  %v513 = vpop.f32.mrb[0].mxu0
  %v514 = vadd.f32 %v89, %v513
  %v515 = vpop.f32.mrb[0].mxu0
  %v516 = vpop.f32.mrb[0].mxu0
  %v517 = vadd.f32 %v89, %v516
  %v518 = vpop.f32.mrb[0].mxu0
  %519 = vmatprep.mubr.bf16.mxu0 0
  %520 = vmatmul.mubr.bf16.gmra.mrb[0].mxu0 %v313
  %v521 = vpop.f32.mrb[0].mxu0
  %v522 = vadd.f32 %v89, %v521
  %v523 = vpop.f32.mrb[0].mxu0
  %v524 = vpop.f32.mrb[0].mxu0
  %v525 = vadd.f32 %v89, %v524
  %v526 = vpop.f32.mrb[0].mxu0
  %527 = vmatprep.mubr.bf16.mxu0 0
  %528 = vmatmul.mubr.bf16.gmra.mrb[0].mxu0 %v316
  %v529 = vpop.f32.mrb[0].mxu0
  %v530 = vadd.f32 %v89, %v529
  %v531 = vpop.f32.mrb[0].mxu0
  %v532 = vpop.f32.mrb[0].mxu0
  %v533 = vadd.f32 %v89, %v532
  %v534 = vpop.f32.mrb[0].mxu0
  %535 = vmatprep.mubr.bf16.mxu0 0
  %536 = vmatmul.mubr.bf16.gmra.mrb[0].mxu0 %v319
  %v537 = vpop.f32.mrb[0].mxu0
  %v538 = vadd.f32 %v89, %v537
  %v539 = vpop.f32.mrb[0].mxu0
  %v540 = vpop.f32.mrb[0].mxu0
  %v541 = vadd.f32 %v89, %v540
  %v542 = vpop.f32.mrb[0].mxu0
  %543 = vmatprep.mubr.bf16.mxu0 0
  %544 = vmatmul.mubr.bf16.gmra.mrb[0].mxu0 %v322
  %v545 = vpop.f32.mrb[0].mxu0
  %v546 = vadd.f32 %v89, %v545
  %v547 = vpop.f32.mrb[0].mxu0
  %v548 = vpop.f32.mrb[0].mxu0
  %v549 = vadd.f32 %v89, %v548
  %v550 = vpop.f32.mrb[0].mxu0
  %551 = vmatprep.mubr.bf16.mxu0 0
  %552 = vmatmul.mubr.bf16.gmra.mrb[0].mxu0 %v325
  %v553 = vpop.f32.mrb[0].mxu0
  %v554 = vadd.f32 %v89, %v553
  %v555 = vpop.f32.mrb[0].mxu0
  %v556 = vpop.f32.mrb[0].mxu0
  %v557 = vadd.f32 %v89, %v556
  %v558 = vpop.f32.mrb[0].mxu0
  %559 = vmatprep.mubr.bf16.mxu0 0
  %560 = vmatmul.mubr.bf16.gmra.mrb[0].mxu0 %v328
  %v561 = vpop.f32.mrb[0].mxu0
  %v562 = vadd.f32 %v89, %v561
  %v563 = vpop.f32.mrb[0].mxu0
  %v564 = vpop.f32.mrb[0].mxu0
  %v565 = vadd.f32 %v89, %v564
  %v566 = vpop.f32.mrb[0].mxu0
  %567 = vmatprep.mubr.bf16.mxu0 0
  %568 = vmatmul.mubr.bf16.gmra.mrb[0].mxu0 %v331
  %v569 = vpop.f32.mrb[0].mxu0
  %v570 = vadd.f32 %v89, %v569
  %v571 = vpop.f32.mrb[0].mxu0
  %v572 = vpop.f32.mrb[0].mxu0
  %v573 = vadd.f32 %v89, %v572
  %v574 = vpop.f32.mrb[0].mxu0
  %575 = vmatprep.mubr.bf16.mxu0 0
  %576 = vmatmul.mubr.bf16.gmra.mrb[0].mxu0 %v334
  %v577 = vpop.f32.mrb[0].mxu0
  %v578 = vadd.f32 %v89, %v577
  %v579 = vpop.f32.mrb[0].mxu0
  %v580 = vpop.f32.mrb[0].mxu0
  %v581 = vadd.f32 %v89, %v580
  %v582 = vpop.f32.mrb[0].mxu0
  %583 = vmatprep.mubr.bf16.mxu0 0
  %584 = vmatmul.mubr.bf16.gmra.mrb[0].mxu0 %v337
  %v585 = vpop.f32.mrb[0].mxu0
  %v586 = vadd.f32 %v89, %v585
  %v587 = vpop.f32.mrb[0].mxu0
  %v588 = vpop.f32.mrb[0].mxu0
  %v589 = vadd.f32 %v89, %v588
  %v590 = vpop.f32.mrb[0].mxu0
  %591 = vmatprep.mubr.bf16.mxu0 0
  %592 = vmatmul.mubr.bf16.gmra.mrb[0].mxu0 %v340
  %v593 = vpop.f32.mrb[0].mxu0
  %v594 = vadd.f32 %v89, %v593
  %v595 = vpop.f32.mrb[0].mxu0
  %v596 = vpop.f32.mrb[0].mxu0
  %v597 = vadd.f32 %v89, %v596
  %v598 = vpop.f32.mrb[0].mxu0
  %599 = vmatprep.mubr.bf16.mxu0 0
  %600 = vmatmul.mubr.bf16.gmra.mrb[0].mxu0 %v343
  %v601 = vpop.f32.mrb[0].mxu0
  %v602 = vadd.f32 %v89, %v601
  %v603 = vpop.f32.mrb[0].mxu0
  %v604 = vpop.f32.mrb[0].mxu0
  %v605 = vadd.f32 %v89, %v604
  %v606 = vpop.f32.mrb[0].mxu0
  %607 = vmatprep.mubr.bf16.mxu0 0
  %608 = vmatmul.mubr.bf16.gmra.mrb[0].mxu0 %v346
  %v609 = vpop.f32.mrb[0].mxu0
  %v610 = vadd.f32 %v89, %v609
  %v611 = vpop.f32.mrb[0].mxu0
  %v612 = vpop.f32.mrb[0].mxu0
  %v613 = vadd.f32 %v89, %v612
  %v614 = vpop.f32.mrb[0].mxu0
  %615 = vmatprep.mubr.bf16.mxu0 0
  %616 = vmatmul.mubr.bf16.gmra.mrb[0].mxu0 %v349
  %v617 = vpop.f32.mrb[0].mxu0
  %v618 = vadd.f32 %v89, %v617
  %v619 = vpop.f32.mrb[0].mxu0
  %v620 = vpop.f32.mrb[0].mxu0
  %v621 = vadd.f32 %v89, %v620
  %v622 = vpop.f32.mrb[0].mxu0
  %623 = vmatprep.mubr.bf16.mxu0 0
  %624 = vmatmul.mubr.bf16.gmra.mrb[0].mxu0 %v352
  %v625 = vpop.f32.mrb[0].mxu0
  %v626 = vadd.f32 %v89, %v625
  %v627 = vpop.f32.mrb[0].mxu0
  %v628 = vpop.f32.mrb[0].mxu0
  %v629 = vadd.f32 %v89, %v628
  %v630 = vpop.f32.mrb[0].mxu0
  %631 = vmatprep.mubr.bf16.mxu0 0
  %632 = vmatmul.mubr.bf16.gmra.mrb[0].mxu0 %v355
  %v633 = vpop.f32.mrb[0].mxu0
  %v634 = vadd.f32 %v89, %v633
  %v635 = vpop.f32.mrb[0].mxu0
  %v636 = vpop.f32.mrb[0].mxu0
  %v637 = vadd.f32 %v89, %v636
  %v638 = vpop.f32.mrb[0].mxu0
  %639 = vmatprep.mubr.bf16.mxu0 0
  %640 = vmatmul.mubr.bf16.gmra.mrb[0].mxu0 %v358
  %v641 = vpop.f32.mrb[0].mxu0
  %v642 = vadd.f32 %v89, %v641
  %v643 = vpop.f32.mrb[0].mxu0
  %v644 = vpop.f32.mrb[0].mxu0
  %v645 = vadd.f32 %v89, %v644
  %v646 = vpop.f32.mrb[0].mxu0
  %647 = vmatprep.mubr.bf16.mxu0 0
  %648 = vmatmul.mubr.bf16.gmra.mrb[0].mxu0 %v361
  %v649 = vpop.f32.mrb[0].mxu0
  %v650 = vadd.f32 %v89, %v649
  %v651 = vpop.f32.mrb[0].mxu0
  %v652 = vpop.f32.mrb[0].mxu0
  %v653 = vadd.f32 %v89, %v652
  %v654 = vpop.f32.mrb[0].mxu0
  %655 = vdwg.mxu0
  %v656 = vmax.f32 %v402, 0.0
  %v657 = vmax.f32 %v405, 0.0
  %v658 = vmax.f32 %v410, 0.0
  %v659 = vmax.f32 %v413, 0.0
  %v660 = vmax.f32 %v418, 0.0
  %v661 = vmax.f32 %v421, 0.0
  %v662 = vmax.f32 %v426, 0.0
  %v663 = vmax.f32 %v429, 0.0
  %v664 = vmax.f32 %v434, 0.0
  %v665 = vmax.f32 %v437, 0.0
  %v666 = vmax.f32 %v442, 0.0
  %v667 = vmax.f32 %v445, 0.0
  %v668 = vmax.f32 %v450, 0.0
  %v669 = vmax.f32 %v453, 0.0
  %v670 = vmax.f32 %v458, 0.0
  %v671 = vmax.f32 %v461, 0.0
  %v672 = vmax.f32 %v466, 0.0
  %v673 = vmax.f32 %v469, 0.0
  %v674 = vmax.f32 %v474, 0.0
  %v675 = vmax.f32 %v477, 0.0
  %v676 = vmax.f32 %v482, 0.0
  %v677 = vmax.f32 %v485, 0.0
  %v678 = vmax.f32 %v490, 0.0
  %v679 = vmax.f32 %v493, 0.0
  %v680 = vmax.f32 %v498, 0.0
  %v681 = vmax.f32 %v501, 0.0
  %v682 = vmax.f32 %v506, 0.0
  %v683 = vmax.f32 %v509, 0.0
  %v684 = vmax.f32 %v514, 0.0
  %v685 = vmax.f32 %v517, 0.0
  %v686 = vmax.f32 %v522, 0.0
  %v687 = vmax.f32 %v525, 0.0
  %v688 = vmax.f32 %v530, 0.0
  %v689 = vmax.f32 %v533, 0.0
  %v690 = vmax.f32 %v538, 0.0
  %v691 = vmax.f32 %v541, 0.0
  %v692 = vmax.f32 %v546, 0.0
  %v693 = vmax.f32 %v549, 0.0
  %v694 = vmax.f32 %v554, 0.0
  %v695 = vmax.f32 %v557, 0.0
  %v696 = vmax.f32 %v562, 0.0
  %v697 = vmax.f32 %v565, 0.0
  %v698 = vmax.f32 %v570, 0.0
  %v699 = vmax.f32 %v573, 0.0
  %v700 = vmax.f32 %v578, 0.0
  %v701 = vmax.f32 %v581, 0.0
  %v702 = vmax.f32 %v586, 0.0
  %v703 = vmax.f32 %v589, 0.0
  %v704 = vmax.f32 %v594, 0.0
  %v705 = vmax.f32 %v597, 0.0
  %v706 = vmax.f32 %v602, 0.0
  %v707 = vmax.f32 %v605, 0.0
  %v708 = vmax.f32 %v610, 0.0
  %v709 = vmax.f32 %v613, 0.0
  %v710 = vmax.f32 %v618, 0.0
  %v711 = vmax.f32 %v621, 0.0
  %v712 = vmax.f32 %v626, 0.0
  %v713 = vmax.f32 %v629, 0.0
  %v714 = vmax.f32 %v634, 0.0
  %v715 = vmax.f32 %v637, 0.0
  %v716 = vmax.f32 %v642, 0.0
  %v717 = vmax.f32 %v645, 0.0
  %v718 = vmax.f32 %v650, 0.0
  %v719 = vmax.f32 %v653, 0.0
  %vm720 = vcmask 64512
  %721 = vst.msk [vmem:[%s3] sm:$0xff] %vm720, %v656
  %722 = vst.msk [vmem:[%s3 + $0x8] sm:$0xff] %vm720, %v657
  %723 = vst.msk [vmem:[%s3 + $0x10] sm:$0xff] %vm720, %v658
  %724 = vst.msk [vmem:[%s3 + $0x18] sm:$0xff] %vm720, %v659
  %725 = vst.msk [vmem:[%s3 + $0x20] sm:$0xff] %vm720, %v660
  %726 = vst.msk [vmem:[%s3 + $0x28] sm:$0xff] %vm720, %v661
  %727 = vst.msk [vmem:[%s3 + $0x30] sm:$0xff] %vm720, %v662
  %728 = vst.msk [vmem:[%s3 + $0x38] sm:$0xff] %vm720, %v663
  %729 = vst.msk [vmem:[%s3 + $0x40] sm:$0xff] %vm720, %v664
  %730 = vst.msk [vmem:[%s3 + $0x48] sm:$0xff] %vm720, %v665
  %731 = vst.msk [vmem:[%s3 + $0x50] sm:$0xff] %vm720, %v666
  %732 = vst.msk [vmem:[%s3 + $0x58] sm:$0xff] %vm720, %v667
  %733 = vst.msk [vmem:[%s3 + $0x60] sm:$0xff] %vm720, %v668
  %734 = vst.msk [vmem:[%s3 + $0x68] sm:$0xff] %vm720, %v669
  %735 = vst.msk [vmem:[%s3 + $0x70] sm:$0xff] %vm720, %v670
  %736 = vst.msk [vmem:[%s3 + $0x78] sm:$0xff] %vm720, %v671
  %737 = vst.msk [vmem:[%s3 + $0x80] sm:$0xff] %vm720, %v672
  %738 = vst.msk [vmem:[%s3 + $0x88] sm:$0xff] %vm720, %v673
  %739 = vst.msk [vmem:[%s3 + $0x90] sm:$0xff] %vm720, %v674
  %740 = vst.msk [vmem:[%s3 + $0x98] sm:$0xff] %vm720, %v675
  %741 = vst.msk [vmem:[%s3 + $0xa0] sm:$0xff] %vm720, %v676
  %742 = vst.msk [vmem:[%s3 + $0xa8] sm:$0xff] %vm720, %v677
  %743 = vst.msk [vmem:[%s3 + $0xb0] sm:$0xff] %vm720, %v678
  %744 = vst.msk [vmem:[%s3 + $0xb8] sm:$0xff] %vm720, %v679
  %745 = vst.msk [vmem:[%s3 + $0xc0] sm:$0xff] %vm720, %v680
  %746 = vst.msk [vmem:[%s3 + $0xc8] sm:$0xff] %vm720, %v681
  %747 = vst.msk [vmem:[%s3 + $0xd0] sm:$0xff] %vm720, %v682
  %748 = vst.msk [vmem:[%s3 + $0xd8] sm:$0xff] %vm720, %v683
  %749 = vst.msk [vmem:[%s3 + $0xe0] sm:$0xff] %vm720, %v684
  %750 = vst.msk [vmem:[%s3 + $0xe8] sm:$0xff] %vm720, %v685
  %751 = vst.msk [vmem:[%s3 + $0xf0] sm:$0xff] %vm720, %v686
  %752 = vst.msk [vmem:[%s3 + $0xf8] sm:$0xff] %vm720, %v687
  %753 = vst.msk [vmem:[%s3 + $0x100] sm:$0xff] %vm720, %v688
  %754 = vst.msk [vmem:[%s3 + $0x108] sm:$0xff] %vm720, %v689
  %755 = vst.msk [vmem:[%s3 + $0x110] sm:$0xff] %vm720, %v690
  %756 = vst.msk [vmem:[%s3 + $0x118] sm:$0xff] %vm720, %v691
  %757 = vst.msk [vmem:[%s3 + $0x120] sm:$0xff] %vm720, %v692
  %758 = vst.msk [vmem:[%s3 + $0x128] sm:$0xff] %vm720, %v693
  %759 = vst.msk [vmem:[%s3 + $0x130] sm:$0xff] %vm720, %v694
  %760 = vst.msk [vmem:[%s3 + $0x138] sm:$0xff] %vm720, %v695
  %761 = vst.msk [vmem:[%s3 + $0x140] sm:$0xff] %vm720, %v696
  %762 = vst.msk [vmem:[%s3 + $0x148] sm:$0xff] %vm720, %v697
  %763 = vst.msk [vmem:[%s3 + $0x150] sm:$0xff] %vm720, %v698
  %764 = vst.msk [vmem:[%s3 + $0x158] sm:$0xff] %vm720, %v699
  %765 = vst.msk [vmem:[%s3 + $0x160] sm:$0xff] %vm720, %v700
  %766 = vst.msk [vmem:[%s3 + $0x168] sm:$0xff] %vm720, %v701
  %767 = vst.msk [vmem:[%s3 + $0x170] sm:$0xff] %vm720, %v702
  %768 = vst.msk [vmem:[%s3 + $0x178] sm:$0xff] %vm720, %v703
  %769 = vst.msk [vmem:[%s3 + $0x180] sm:$0xff] %vm720, %v704
  %770 = vst.msk [vmem:[%s3 + $0x188] sm:$0xff] %vm720, %v705
  %771 = vst.msk [vmem:[%s3 + $0x190] sm:$0xff] %vm720, %v706
  %772 = vst.msk [vmem:[%s3 + $0x198] sm:$0xff] %vm720, %v707
  %773 = vst.msk [vmem:[%s3 + $0x1a0] sm:$0xff] %vm720, %v708
  %774 = vst.msk [vmem:[%s3 + $0x1a8] sm:$0xff] %vm720, %v709
  %775 = vst.msk [vmem:[%s3 + $0x1b0] sm:$0xff] %vm720, %v710
  %776 = vst.msk [vmem:[%s3 + $0x1b8] sm:$0xff] %vm720, %v711
  %777 = vst.msk [vmem:[%s3 + $0x1c0] sm:$0xff] %vm720, %v712
  %778 = vst.msk [vmem:[%s3 + $0x1c8] sm:$0xff] %vm720, %v713
  %779 = vst.msk [vmem:[%s3 + $0x1d0] sm:$0xff] %vm720, %v714
  %780 = vst.msk [vmem:[%s3 + $0x1d8] sm:$0xff] %vm720, %v715
  %781 = vst.msk [vmem:[%s3 + $0x1e0] sm:$0xff] %vm720, %v716
  %782 = vst.msk [vmem:[%s3 + $0x1e8] sm:$0xff] %vm720, %v717
  %783 = vst.msk [vmem:[%s3 + $0x1f0] sm:$0xff] %vm720, %v718
  %784 = vst.msk [vmem:[%s3 + $0x1f8] sm:$0xff] %vm720, %v719
  // Predicated region
  $region14: #{dense_layer_forward.1} parent=0 // pred_check
    _
  $region15: #{dense_layer_forward.1} parent=0 // pred_check_branch
    %786 = sbr.rel (0) target = $region17
  $region16: #{dense_layer_forward.1} parent=0 // pred_region
    _
  $region17: #{dense_layer_forward.1} parent=0 // pred_fallthru
    _
  // Predicated region
  $region18: #{dense_layer_forward.1} parent=0 // pred_check
    _
  $region19: #{dense_layer_forward.1} parent=0 // pred_check_branch
    %788 = sbr.rel (0) target = $region21
  $region20: #{dense_layer_forward.1} parent=0 // pred_region
    _
  $region21: #{dense_layer_forward.1} parent=0 // pred_fallthru
    _

</llo_original>
